<compile_context>
chip_gen: v7x
topology: tpu7x:2x2x1
jax: 0.10.0
libtpu: 0.0.40
codegen_flags: <defaults>
</compile_context>

<pallas_src>
import functools
import math

import jax
import jax.numpy as jnp
from jax.experimental import pallas as pl
from jax.experimental.pallas import tpu as pltpu


# --------------------------------------------------------------------------
# Kernels
# --------------------------------------------------------------------------
def _mlp_resident_kernel(x_ref, wfc_ref, bfc_ref, wpr_ref, bpr_ref, o_ref):
    """Whole-weight-resident path: one grid axis over row tiles of x."""
    # c_fc: (tm, C) @ (C, H) -> (tm, H); bf16 MXU operands, f32 accumulation.
    h = jnp.dot(x_ref[...], wfc_ref[...],
                preferred_element_type=jnp.float32) + bfc_ref[...]
    # tanh GELU -> EUP slot (hidden under the MXU on v6e/v7x).
    g = jax.nn.gelu(h, approximate=True)
    # c_proj: (tm, H) @ (H, C) -> (tm, C); lane-dense output store.
    y = jnp.dot(g.astype(jnp.bfloat16), wpr_ref[...],
                preferred_element_type=jnp.float32) + bpr_ref[...]
    # TODO(synk): dropout (resid_pdrop) omitted -- identity at inference.
    o_ref[...] = y.astype(o_ref.dtype)


def _mlp_htiled_kernel(x_ref, wfc_ref, bfc_ref, wpr_ref, bpr_ref, o_ref,
                       acc_ref):
    """H-tiled path: grid = (row tiles, hidden tiles); bounds VMEM on v7x."""
    j = pl.program_id(1)

    @pl.when(j == 0)
    def _():
        acc_ref[...] = jnp.zeros_like(acc_ref)

    h = jnp.dot(x_ref[...], wfc_ref[...],
                preferred_element_type=jnp.float32) + bfc_ref[...]
    g = jax.nn.gelu(h, approximate=True)
    acc_ref[...] += jnp.dot(g.astype(jnp.bfloat16), wpr_ref[...],
                            preferred_element_type=jnp.float32)

    @pl.when(j == pl.num_programs(1) - 1)
    def _():
        # TODO(synk): dropout (resid_pdrop) omitted -- identity at inference.
        o_ref[...] = (acc_ref[...] + bpr_ref[...]).astype(o_ref.dtype)


# --------------------------------------------------------------------------
# One-time hardware / feature queries (cached; narrow in scope)
# --------------------------------------------------------------------------
@functools.lru_cache(maxsize=None)
def _tpu_defaults():
    vmem_cap = 64 * 1024 * 1024          # conservative default (v7x per-TC)
    try:
        info = pltpu.get_tpu_info()
        cap = getattr(info, "vmem_capacity_bytes", None)
        if cap:
            vmem_cap = int(cap)
    except Exception:                    # query only; fall back to safe default
        pass
    if vmem_cap >= 100 * 1024 * 1024:    # v5e / v6e: 128 MiB physical VMEM
        limit = min(96 * 1024 * 1024, int(0.75 * vmem_cap))
        return {"vmem_limit_bytes": limit, "block_m": 512}
    limit = min(48 * 1024 * 1024, int(0.75 * vmem_cap))
    return {"vmem_limit_bytes": limit, "block_m": 256}


def _probe_copy_kernel(x_ref, o_ref):
    o_ref[...] = x_ref[...]


@functools.lru_cache(maxsize=None)
def _buffered_one_supported():
    """One-time feature probe for pipeline_mode=pl.Buffered(1)."""
    try:
        spec = pl.BlockSpec((8, 128), lambda i: (0, 0),
                            pipeline_mode=pl.Buffered(1))
        out = pl.pallas_call(
            _probe_copy_kernel,
            out_shape=jax.ShapeDtypeStruct((8, 128), jnp.float32),
            grid=(1,),
            in_specs=[spec],
            out_specs=pl.BlockSpec((8, 128), lambda i: (0, 0)),
        )(jnp.zeros((8, 128), jnp.float32))
        jax.block_until_ready(out)
        return True
    except Exception:
        return False


# --------------------------------------------------------------------------
# Parameter preprocessing (run ONCE, outside the per-call path)
# --------------------------------------------------------------------------
def prepare_mlp_params(params):
    """bf16 MXU weights, (1, N) f32 biases — stored once, reused every call."""
    C, H = params["w_fc"].shape
    return {
        "w_fc":   params["w_fc"].astype(jnp.bfloat16),
        "w_proj": params["w_proj"].astype(jnp.bfloat16),
        "b_fc":   params["b_fc"].reshape(1, H).astype(jnp.float32),
        "b_proj": params["b_proj"].reshape(1, C).astype(jnp.float32),
    }


# --------------------------------------------------------------------------
# Forward wrapper
# --------------------------------------------------------------------------
def _pick_tn(H, tm, C, out_itemsize, vmem_budget):
    """MXU-friendly H chunk (multiple of 256/128) that divides H and fits."""
    for tn in (1024, 512, 256, 128):
        if H % tn:
            continue
        w = 2 * (2 * C * tn * 2)                       # double-buffered bf16 chunks
        io = 2 * tm * C * 2 + 2 * tm * C * out_itemsize
        temps = 3 * tm * tn * 4 + tm * C * 4           # h/g chunks + acc scratch
        if w + io + temps < 0.75 * vmem_budget:
            return tn
    return None


def mlp_forward(x, prepped, *, block_m=None):
    """y = c_proj(gelu(c_fc(x))); dropout identity (inference).

    `prepped` must come from prepare_mlp_params (bf16 weights, (1,N) biases).
    """
    orig_shape = x.shape
    C = orig_shape[-1]
    H = prepped["w_fc"].shape[-1]
    M = math.prod(orig_shape[:-1])
    out_dtype = x.dtype
    out_itemsize = jnp.dtype(out_dtype).itemsize

    cfg = _tpu_defaults()
    if block_m is None:
        block_m = cfg["block_m"]
    vmem_limit = cfg["vmem_limit_bytes"]

    # bf16 activations once in the wrapper; kernel consumes them directly.
    x2 = x.reshape(M, C).astype(jnp.bfloat16)

    # Row tile: block_m is a multiple of 8; tm == M (full dim) for tiny inputs.
    tm = M if M <= block_m else block_m
    grid_m = pl.cdiv(M, tm)        # ragged last block handled by Pallas

    single_buf = _buffered_one_supported()
    weight_buffers = 1 if single_buf else 2
    resident_bytes = (weight_buffers * 2 * 2 * C * H            # two bf16 matrices
                      + 2 * tm * C * 2 + 2 * tm * C * out_itemsize
                      + 3 * tm * H * 4)                         # (tm, H) temporaries
    use_resident = resident_bytes < 0.75 * vmem_limit

    if use_resident:
        def w_spec(shape):
            if single_buf:
                return pl.BlockSpec(shape, lambda i: (0, 0),
                                    pipeline_mode=pl.Buffered(1))
            return pl.BlockSpec(shape, lambda i: (0, 0))

        out = pl.pallas_call(
            _mlp_resident_kernel,
            out_shape=jax.ShapeDtypeStruct((M, C), out_dtype),
            grid_spec=pltpu.PrefetchScalarGridSpec(
                num_scalar_prefetch=0,
                grid=(grid_m,),
                in_specs=[
                    pl.BlockSpec((tm, C), lambda i: (i, 0)),
                    w_spec((C, H)),
                    w_spec((1, H)),
                    w_spec((H, C)),
                    w_spec((1, C)),
                ],
                out_specs=pl.BlockSpec((tm, C), lambda i: (i, 0)),
            ),
            compiler_params=pltpu.CompilerParams(
                dimension_semantics=("parallel",),
                vmem_limit_bytes=vmem_limit,
            ),
        )(x2, prepped["w_fc"], prepped["b_fc"],
          prepped["w_proj"], prepped["b_proj"])
        return out.reshape(orig_shape)

    # Weights too large for residency (e.g. big C on v7x's 64 MiB VMEM):
    # tile the hidden dim, accumulate c_proj partial products in f32 scratch.
    tn = _pick_tn(H, tm, C, out_itemsize, vmem_limit)
    if tn is None:
        # TODO(synk): H=4C has no MXU-friendly divisor; fall back to a single
        # full-H chunk (may exceed the VMEM budget for exotic shapes).
        tn = H
    grid_h = H // tn

    out = pl.pallas_call(
        _mlp_htiled_kernel,
        out_shape=jax.ShapeDtypeStruct((M, C), out_dtype),
        grid_spec=pltpu.PrefetchScalarGridSpec(
            num_scalar_prefetch=0,
            grid=(grid_m, grid_h),
            in_specs=[
                pl.BlockSpec((tm, C), lambda i, j: (i, 0)),
                pl.BlockSpec((C, tn), lambda i, j: (0, j)),
                pl.BlockSpec((1, tn), lambda i, j: (0, j)),
                pl.BlockSpec((tn, C), lambda i, j: (j, 0)),
                pl.BlockSpec((1, C), lambda i, j: (0, 0)),
            ],
            out_specs=pl.BlockSpec((tm, C), lambda i, j: (i, 0)),
            scratch_shapes=[pltpu.VMEM((tm, C), jnp.float32)],
        ),
        compiler_params=pltpu.CompilerParams(
            dimension_semantics=("parallel", "arbitrary"),
            vmem_limit_bytes=vmem_limit,
        ),
    )(x2, prepped["w_fc"], prepped["b_fc"],
      prepped["w_proj"], prepped["b_proj"])
    return out.reshape(orig_shape)


# -------------------------- pure-JAX reference ------------------------------
def reference_mlp(x, p):
    h = x @ p["w_fc"] + p["b_fc"]
    g = jax.nn.gelu(h, approximate=False)   # torch nn.GELU() default (exact erf)
    return g @ p["w_proj"] + p["b_proj"]


if __name__ == "__main__":
    B, T, C = 2, 8, 32          # small GPT config: n_embd = 32

    key = jax.random.PRNGKey(0)
    ks = jax.random.split(key, 6)
    init = lambda k, shape: (0.02 * jax.random.normal(k, shape)).astype(jnp.float32)

    params = {
        # torch Linear weights are (out, in); stored pre-transposed (in, out)
        "w_fc":   init(ks[0], (C, 4 * C)),
        "b_fc":   init(ks[1], (4 * C,)),
        "w_proj": init(ks[2], (4 * C, C)),
        "b_proj": init(ks[3], (C,)),
    }
    x = jax.random.normal(ks[4], (B, T, C), jnp.float32)

    prepped = prepare_mlp_params(params)        # one-time weight prep (bf16)
    out = mlp_forward(x, prepped)
    out = jax.block_until_ready(out)

    ref = reference_mlp(x, params)
    assert out.shape == (B, T, C)
    # bf16 MXU operands / bf16 activations / tanh GELU vs exact-erf reference
    # -> slightly loosened tolerance.
    assert jnp.allclose(out, ref, atol=5e-3, rtol=5e-2), "mismatch vs reference"

    print("KERNEL_OK")
</pallas_src>

<mosaic_0001>
module attributes {stable_mosaic.version = 11 : i64} {
  func.func @_probe_copy_kernel(%arg0: i32, %arg1: memref<8x128xf32, #tpu.memory_space<vmem>>, %arg2: memref<8x128xf32, #tpu.memory_space<vmem>>) attributes {dimension_semantics = [#tpu.dimension_semantics<arbitrary>], iteration_bounds = array<i64: 1>, scalar_prefetch = 0 : i64, scratch_operands = 0 : i64, tpu.core_type = #tpu.core_type<tc>, window_params = [{pipeline_mode = #tpu.pipeline_mode<synchronous>, transform_indices = @transform_0, window_bounds = array<i64: 8, 128>}, {pipeline_mode = #tpu.pipeline_mode<synchronous>, transform_indices = @transform_1, window_bounds = array<i64: 8, 128>}]} {
    %c0 = arith.constant 0 : index
    %c0_0 = arith.constant 0 : index
    %0 = vector.load %arg1[%c0, %c0_0] : memref<8x128xf32, #tpu.memory_space<vmem>>, vector<8x128xf32>
    %c0_1 = arith.constant 0 : index
    %c0_2 = arith.constant 0 : index
    %1 = vector.load %arg2[%c0_1, %c0_2] : memref<8x128xf32, #tpu.memory_space<vmem>>, vector<8x128xf32>
    tpu.vector_store %arg2[%c0_1, %c0_2], %0 {strides = array<i32>} : memref<8x128xf32, #tpu.memory_space<vmem>>, vector<8x128xf32>,
    return
  }
  func.func @transform_0(%arg0: i32) -> (i32, i32) {
    %c0_i32 = arith.constant 0 : i32
    %c0_i32_0 = arith.constant 0 : i32
    %c0_i32_1 = arith.constant 0 : i32
    return %c0_i32, %c0_i32_0 : i32, i32
  }
  func.func @transform_1(%arg0: i32) -> (i32, i32) {
    %c0_i32 = arith.constant 0 : i32
    %c0_i32_0 = arith.constant 0 : i32
    %c0_i32_1 = arith.constant 0 : i32
    return %c0_i32, %c0_i32_0 : i32, i32
  }
}

module attributes {stable_mosaic.version = 11 : i64} {
  func.func @_mlp_resident_kernel(%arg0: i32, %arg1: memref<16x32xbf16, #tpu.memory_space<vmem>>, %arg2: memref<32x128xbf16, #tpu.memory_space<vmem>>, %arg3: memref<1x128xf32, #tpu.memory_space<vmem>>, %arg4: memref<128x32xbf16, #tpu.memory_space<vmem>>, %arg5: memref<1x32xf32, #tpu.memory_space<vmem>>, %arg6: memref<16x32xf32, #tpu.memory_space<vmem>>) attributes {dimension_semantics = [#tpu.dimension_semantics<parallel>], iteration_bounds = array<i64: 1>, scalar_prefetch = 0 : i64, scratch_operands = 0 : i64, tpu.core_type = #tpu.core_type<tc>, window_params = [{transform_indices = @transform_0, window_bounds = array<i64: 16, 32>}, {pipeline_mode = #tpu.pipeline_mode<synchronous>, transform_indices = @transform_1, window_bounds = array<i64: 32, 128>}, {pipeline_mode = #tpu.pipeline_mode<synchronous>, transform_indices = @transform_2, window_bounds = array<i64: 1, 128>}, {pipeline_mode = #tpu.pipeline_mode<synchronous>, transform_indices = @transform_3, window_bounds = array<i64: 128, 32>}, {pipeline_mode = #tpu.pipeline_mode<synchronous>, transform_indices = @transform_4, window_bounds = array<i64: 1, 32>}, {transform_indices = @transform_5, window_bounds = array<i64: 16, 32>}]} {
    %c0 = arith.constant 0 : index
    %c0_0 = arith.constant 0 : index
    %0 = vector.load %arg1[%c0, %c0_0] : memref<16x32xbf16, #tpu.memory_space<vmem>>, vector<16x32xbf16>
    %c0_1 = arith.constant 0 : index
    %c0_2 = arith.constant 0 : index
    %1 = vector.load %arg2[%c0_1, %c0_2] : memref<32x128xbf16, #tpu.memory_space<vmem>>, vector<32x128xbf16>
    %cst = arith.constant dense<0.000000e+00> : vector<16x128xf32>
    %2 = tpu.matmul %0, %1, %cst {dimension_numbers = #tpu.dot_dimension_numbers<[1], [0], [0], [1], [0, 0, 1, 1], [], []>} : vector<16x32xbf16>, vector<32x128xbf16>, vector<16x128xf32> -> vector<16x128xf32>
    %c0_3 = arith.constant 0 : index
    %c0_4 = arith.constant 0 : index
    %3 = vector.load %arg3[%c0_3, %c0_4] : memref<1x128xf32, #tpu.memory_space<vmem>>, vector<1x128xf32>
    %4 = vector.broadcast %3 : vector<1x128xf32> to vector<16x128xf32>
    %5 = arith.addf %2, %4 : vector<16x128xf32>
    %6 = arith.mulf %5, %5 : vector<16x128xf32>
    %7 = arith.mulf %5, %6 : vector<16x128xf32>
    %cst_5 = arith.constant 4.471500e-02 : f32
    %8 = vector.broadcast %cst_5 : f32 to vector<16x128xf32>
    %9 = arith.mulf %8, %7 : vector<16x128xf32>
    %10 = arith.addf %5, %9 : vector<16x128xf32>
    %cst_6 = arith.constant 0.797884583 : f32
    %11 = vector.broadcast %cst_6 : f32 to vector<16x128xf32>
    %12 = arith.mulf %11, %10 : vector<16x128xf32>
    %13 = math.tanh %12 : vector<16x128xf32>
    %cst_7 = arith.constant 1.000000e+00 : f32
    %14 = vector.broadcast %cst_7 : f32 to vector<16x128xf32>
    %15 = arith.addf %14, %13 : vector<16x128xf32>
    %cst_8 = arith.constant 5.000000e-01 : f32
    %16 = vector.broadcast %cst_8 : f32 to vector<16x128xf32>
    %17 = arith.mulf %16, %15 : vector<16x128xf32>
    %18 = arith.mulf %5, %17 : vector<16x128xf32>
    %19 = arith.truncf %18 : vector<16x128xf32> to vector<16x128xbf16>
    %c0_9 = arith.constant 0 : index
    %c0_10 = arith.constant 0 : index
    %20 = vector.load %arg4[%c0_9, %c0_10] : memref<128x32xbf16, #tpu.memory_space<vmem>>, vector<128x32xbf16>
    %cst_11 = arith.constant dense<0.000000e+00> : vector<16x32xf32>
    %21 = tpu.matmul %19, %20, %cst_11 {dimension_numbers = #tpu.dot_dimension_numbers<[1], [0], [0], [1], [0, 0, 1, 1], [], []>} : vector<16x128xbf16>, vector<128x32xbf16>, vector<16x32xf32> -> vector<16x32xf32>
    %c0_12 = arith.constant 0 : index
    %c0_13 = arith.constant 0 : index
    %22 = vector.load %arg5[%c0_12, %c0_13] : memref<1x32xf32, #tpu.memory_space<vmem>>, vector<1x32xf32>
    %23 = vector.broadcast %22 : vector<1x32xf32> to vector<16x32xf32>
    %24 = arith.addf %21, %23 : vector<16x32xf32>
    %c0_14 = arith.constant 0 : index
    %c0_15 = arith.constant 0 : index
    %25 = vector.load %arg6[%c0_14, %c0_15] : memref<16x32xf32, #tpu.memory_space<vmem>>, vector<16x32xf32>
    tpu.vector_store %arg6[%c0_14, %c0_15], %24 {strides = array<i32>} : memref<16x32xf32, #tpu.memory_space<vmem>>, vector<16x32xf32>,
    return
  }
  func.func @transform_0(%arg0: i32) -> (i32, i32) {
    %c0_i32 = arith.constant 0 : i32
    %c0_i32_0 = arith.constant 0 : i32
    return %arg0, %c0_i32 : i32, i32
  }
  func.func @transform_1(%arg0: i32) -> (i32, i32) {
    %c0_i32 = arith.constant 0 : i32
    %c0_i32_0 = arith.constant 0 : i32
    %c0_i32_1 = arith.constant 0 : i32
    return %c0_i32, %c0_i32_0 : i32, i32
  }
  func.func @transform_2(%arg0: i32) -> (i32, i32) {
    %c0_i32 = arith.constant 0 : i32
    %c0_i32_0 = arith.constant 0 : i32
    %c0_i32_1 = arith.constant 0 : i32
    return %c0_i32, %c0_i32_0 : i32, i32
  }
  func.func @transform_3(%arg0: i32) -> (i32, i32) {
    %c0_i32 = arith.constant 0 : i32
    %c0_i32_0 = arith.constant 0 : i32
    %c0_i32_1 = arith.constant 0 : i32
    return %c0_i32, %c0_i32_0 : i32, i32
  }
  func.func @transform_4(%arg0: i32) -> (i32, i32) {
    %c0_i32 = arith.constant 0 : i32
    %c0_i32_0 = arith.constant 0 : i32
    %c0_i32_1 = arith.constant 0 : i32
    return %c0_i32, %c0_i32_0 : i32, i32
  }
  func.func @transform_5(%arg0: i32) -> (i32, i32) {
    %c0_i32 = arith.constant 0 : i32
    %c0_i32_0 = arith.constant 0 : i32
    return %arg0, %c0_i32 : i32, i32
  }
}

</mosaic_0001>

<llo_original>
// kernel: tpu_custom_call.1
$region0: #{tpu_custom_call.1}
  #allocation0 [shape = 'u32[]', space=smem, size = 0x4, offset = 0x4, fixed_abs, tag = 'smem constant byte address 0x4 - core index']
  #allocation1 [shape = 'u32[144,128]{1,0:T(1,128)}', space=vmem, size = 0x12000, scoped, tag = 'internal scratch']
  %s0 = inlined_call_operand.hbm [shape: f32[8,128], index: 0, kind: input, shape index: {}]
  %s1 = inlined_call_operand.hbm [shape: f32[8,128], index: 1, kind: output, shape index: {}]
  %s2 = sld [smem:[#allocation0]]
  $region18: #{tpu_custom_call.1} parent=0
    _
  %s4 = ssub.s32 1, %s2
  %s5 = scalar_select 0, %s4, %s2
  $region1: #{tpu_custom_call.1} parent=0
    #allocation2 [shape = 'u8[4096]{0}', space=vmem, size = 0x1000, scoped, tag = 'input window, operand 0, single buffered']
    #allocation3 [shape = 's32[1]{0}', space=sflag, size = 0x4, scoped, tag = 'scoped memory for tpu_custom_call.1']
    #allocation4 [shape = 's32[1]{0}', space=sflag, size = 0x4, scoped, tag = 'scoped memory for tpu_custom_call.1']
    #allocation5 [shape = 'u8[4096]{0}', space=vmem, size = 0x1000, scoped, tag = 'output window, operand 0, single buffered']
    %6 = vsyncpa [#allocation3], 0
    %7 = vsyncpa [#allocation4], 0
    // Predicated region
    $region2: #{tpu_custom_call.1} parent=1 // pred_check
      _
    $region3: #{tpu_custom_call.1} parent=1 // pred_check_branch
      %9 = sbr.rel (0) target = $region5
    $region4: #{tpu_custom_call.1} parent=1 // pred_region
      %s11 = ssub.s32 128, 128
      %12 = vsyncadd [#allocation3], %s11
      %s14 = sshll.u32 [#allocation2], 4
      %s15 = int_to_ptr.vmem [resolvable:$true] %s14
      %17 = dma.hbm_to_vmem [thread:$0]  %s0, 128, %s15, [#allocation3]
    $region5: #{tpu_custom_call.1} parent=1 // pred_fallthru
      _
    // Predicated region
    $region6: #{tpu_custom_call.1} parent=1 // pred_check
      _
    $region7: #{tpu_custom_call.1} parent=1 // pred_check_branch
      %19 = sbr.rel (0) target = $region9
    $region8: #{tpu_custom_call.1} parent=1 // pred_region
      %20 = dma.done [#allocation3], 128
    $region9: #{tpu_custom_call.1} parent=1 // pred_fallthru
      _
    %v21 = vld [vmem:[#allocation2] sm:$0xff]
    %22 = vst [vmem:[#allocation5] sm:$0xff] %v21
    // Predicated region
    $region10: #{tpu_custom_call.1} parent=1 // pred_check
      _
    $region11: #{tpu_custom_call.1} parent=1 // pred_check_branch
      %24 = sbr.rel (0) target = $region13
    $region12: #{tpu_custom_call.1} parent=1 // pred_region
      %s26 = ssub.s32 128, 128
      %27 = vsyncadd [#allocation4], %s26
      %s29 = sshll.u32 [#allocation5], 4
      %s30 = int_to_ptr.vmem [resolvable:$true] %s29
      %32 = dma.vmem_to_hbm [thread:$0]  %s30, 128, %s1, [#allocation4]
    $region13: #{tpu_custom_call.1} parent=1 // pred_fallthru
      _
    // Predicated region
    $region14: #{tpu_custom_call.1} parent=1 // pred_check
      _
    $region15: #{tpu_custom_call.1} parent=1 // pred_check_branch
      %34 = sbr.rel (0) target = $region17
    $region16: #{tpu_custom_call.1} parent=1 // pred_region
      %35 = dma.done [#allocation4], 128
    $region17: #{tpu_custom_call.1} parent=1 // pred_fallthru
      _
    %36 = vsyncpa [#allocation3], 1
    %37 = vsyncpa [#allocation4], 1

// kernel: tpu_custom_call.1
$region0: #{tpu_custom_call.1}
  #allocation0 [shape = 'u32[]', space=smem, size = 0x4, offset = 0x4, fixed_abs, tag = 'smem constant byte address 0x4 - core index']
  #allocation1 [shape = 'u32[144,128]{1,0:T(1,128)}', space=vmem, size = 0x12000, scoped, tag = 'internal scratch']
  %s0 = inlined_call_operand.vmem [shape: bf16[16,32], index: 0, kind: input, shape index: {}]
  %s1 = inlined_call_operand.vmem [shape: bf16[32,128], index: 1, kind: input, shape index: {}]
  %s2 = inlined_call_operand.vmem [shape: f32[1,128], index: 2, kind: input, shape index: {}]
  %s3 = inlined_call_operand.vmem [shape: bf16[128,32], index: 3, kind: input, shape index: {}]
  %s4 = inlined_call_operand.vmem [shape: f32[1,32], index: 4, kind: input, shape index: {}]
  %s5 = inlined_call_operand.hbm [shape: f32[16,32], index: 5, kind: output, shape index: {}]
  %s6 = sld [smem:[#allocation0]]
  $region30: #{tpu_custom_call.1} parent=0
    _
  %s8 = ssub.s32 1, %s6
  %s9 = scalar_select 0, %s8, %s6
  $region1: #{tpu_custom_call.1} parent=0
    #allocation2 [shape = 'u8[8192]{0}', space=vmem, size = 0x2000, scoped, tag = 'output window, operand 0, single buffered']
    #allocation3 [shape = 's32[1]{0}', space=sflag, size = 0x4, scoped, tag = 'scoped memory for tpu_custom_call.1']
    %10 = vsyncpa [#allocation3], 0
    // Predicated region
    $region2: #{tpu_custom_call.1} parent=1 // pred_check
      _
    $region3: #{tpu_custom_call.1} parent=1 // pred_check_branch
      %12 = sbr.rel (0) target = $region5
    $region4: #{tpu_custom_call.1} parent=1 // pred_region
      _
    $region5: #{tpu_custom_call.1} parent=1 // pred_fallthru
      _
    // Predicated region
    $region6: #{tpu_custom_call.1} parent=1 // pred_check
      _
    $region7: #{tpu_custom_call.1} parent=1 // pred_check_branch
      %14 = sbr.rel (0) target = $region9
    $region8: #{tpu_custom_call.1} parent=1 // pred_region
      _
    $region9: #{tpu_custom_call.1} parent=1 // pred_fallthru
      _
    // Predicated region
    $region10: #{tpu_custom_call.1} parent=1 // pred_check
      _
    $region11: #{tpu_custom_call.1} parent=1 // pred_check_branch
      %16 = sbr.rel (0) target = $region13
    $region12: #{tpu_custom_call.1} parent=1 // pred_region
      _
    $region13: #{tpu_custom_call.1} parent=1 // pred_fallthru
      _
    // Predicated region
    $region14: #{tpu_custom_call.1} parent=1 // pred_check
      _
    $region15: #{tpu_custom_call.1} parent=1 // pred_check_branch
      %18 = sbr.rel (0) target = $region17
    $region16: #{tpu_custom_call.1} parent=1 // pred_region
      _
    $region17: #{tpu_custom_call.1} parent=1 // pred_fallthru
      _
    // Predicated region
    $region18: #{tpu_custom_call.1} parent=1 // pred_check
      _
    $region19: #{tpu_custom_call.1} parent=1 // pred_check_branch
      %20 = sbr.rel (0) target = $region21
    $region20: #{tpu_custom_call.1} parent=1 // pred_region
      _
    $region21: #{tpu_custom_call.1} parent=1 // pred_fallthru
      _
    %v22 = vld [vmem:[%s0] sm:$0xf]
    %v23 = vld [vmem:[%s0 + $0x4] sm:$0xf]
    %v24 = vld [vmem:[%s1] sm:$0xf]
    %v25 = vld [vmem:[%s1 + $0x4] sm:$0xf]
    %v26 = vld [vmem:[%s1 + $0x8] sm:$0xf]
    %v27 = vld [vmem:[%s1 + $0xc] sm:$0xf]
    %v28 = vld [vmem:[%s2] sm:$0x1]
    %v30 = vlaneseq
    %v31 = vshrl.u32 %v30, 7
    %v32 = vsub.s32 0, %v31
    %v33 = vrot.slane %v28, %v32
    %v37 = vunpack.c.l.b16 %v22
    %v38 = vunpack.c.l.b16 %v23
    %v39 = vpack.c.b16 %v38, %v37
    %v44 = vunpack.c.l.b16 %v24
    %v45 = vunpack.c.l.b16 %v25
    %v46 = vunpack.c.l.b16 %v26
    %v47 = vunpack.c.l.b16 %v27
    %v48 = vpack.c.b16 %v45, %v44
    %v49 = vpack.c.b16 %v47, %v46
    %vm52 = vcmask 261120
    %v54 = vsel %vm52, %v39, 0
    %56 = vmatprep.subr.bf16.mxu0 0
    %57 = vmatpush1.bf16.msra.mxu0 %v48
    %58 = vmatprep.subr.bf16.mxu0 0
    %59 = vmatpush1.bf16.msra.mxu0 %v49
    %60 = vmatprep.subr.bf16.mxu0 0
    %61 = vmatpush1.bf16.msra.mxu0 0
    %62 = vmatprep.subr.bf16.mxu0 0
    %63 = vmatpush1.bf16.msra.mxu0 0
    %64 = vmatprep.subr.bf16.mxu0 0
    %65 = vmatpush1.bf16.msra.mxu0 0
    %66 = vmatprep.subr.bf16.mxu0 0
    %67 = vmatpush1.bf16.msra.mxu0 0
    %68 = vmatprep.subr.bf16.mxu0 0
    %69 = vmatpush1.bf16.msra.mxu0 0
    %70 = vmatprep.subr.bf16.mxu0 0
    %71 = vmatpush1.bf16.msra.mxu0 0
    %72 = vmatprep.subr.bf16.mxu0 0
    %73 = vmatpush1.bf16.msra.mxu0 0
    %74 = vmatprep.subr.bf16.mxu0 0
    %75 = vmatpush1.bf16.msra.mxu0 0
    %76 = vmatprep.subr.bf16.mxu0 0
    %77 = vmatpush1.bf16.msra.mxu0 0
    %78 = vmatprep.subr.bf16.mxu0 0
    %79 = vmatpush1.bf16.msra.mxu0 0
    %80 = vmatprep.subr.bf16.mxu0 0
    %81 = vmatpush1.bf16.msra.mxu0 0
    %82 = vmatprep.subr.bf16.mxu0 0
    %83 = vmatpush1.bf16.msra.mxu0 0
    %84 = vmatprep.subr.bf16.mxu0 0
    %85 = vmatpush1.bf16.msra.mxu0 0
    %86 = vmatprep.subr.bf16.mxu0 0
    %87 = vmatpush1.bf16.msra.mxu0 0
    %88 = vmatprep.mubr.bf16.mxu0 0
    %89 = vmatmul.mubr.bf16.gmra.mrb[0].mxu0 %v54
    %v90 = vpop.f32.mrb[0].mxu0
    %v91 = vadd.f32 %v33, %v90
    %v92 = vpop.f32.mrb[0].mxu0
    %v93 = vpop.f32.mrb[0].mxu0
    %v94 = vadd.f32 %v33, %v93
    %v95 = vpop.f32.mrb[0].mxu0
    %96 = vdwg.mxu0
    %v97 = vmul.f32 %v91, %v91
    %v98 = vmul.f32 %v94, %v94
    %v99 = vmul.f32 %v91, %v97
    %v100 = vmul.f32 %v94, %v98
    %v101 = vmul.f32 %v99, 0.044715
    %v102 = vmul.f32 %v100, 0.044715
    %v103 = vadd.f32 %v91, %v101
    %v104 = vadd.f32 %v94, %v102
    %v105 = vmul.f32 %v103, 0.7978846
    %v106 = vmul.f32 %v104, 0.7978846
    %v107 = vtanh.pop %v105
    %v108 = vtanh.pop %v106
    %v109 = vadd.f32 %v107, 1.0
    %v110 = vadd.f32 %v108, 1.0
    %v111 = vmul.f32 %v109, 0.5
    %v112 = vmul.f32 %v110, 0.5
    %v113 = vmul.f32 %v91, %v111
    %v114 = vmul.f32 %v94, %v112
    %v115 = vpack.c.bf16 %v114, %v113
    %v116 = vld [vmem:[%s3] sm:$0xf]
    %v117 = vld [vmem:[%s3 + $0x4] sm:$0xf]
    %v118 = vld [vmem:[%s3 + $0x8] sm:$0xf]
    %v119 = vld [vmem:[%s3 + $0xc] sm:$0xf]
    %v120 = vld [vmem:[%s3 + $0x10] sm:$0xf]
    %v121 = vld [vmem:[%s3 + $0x14] sm:$0xf]
    %v122 = vld [vmem:[%s3 + $0x18] sm:$0xf]
    %v123 = vld [vmem:[%s3 + $0x1c] sm:$0xf]
    %v124 = vld [vmem:[%s3 + $0x20] sm:$0xf]
    %v125 = vld [vmem:[%s3 + $0x24] sm:$0xf]
    %v126 = vld [vmem:[%s3 + $0x28] sm:$0xf]
    %v127 = vld [vmem:[%s3 + $0x2c] sm:$0xf]
    %v128 = vld [vmem:[%s3 + $0x30] sm:$0xf]
    %v129 = vld [vmem:[%s3 + $0x34] sm:$0xf]
    %v130 = vld [vmem:[%s3 + $0x38] sm:$0xf]
    %v131 = vld [vmem:[%s3 + $0x3c] sm:$0xf]
    %v132 = vld [vmem:[%s4] sm:$0x1]
    %v134 = vlaneseq
    %v135 = vshrl.u32 %v134, 7
    %v136 = vsub.s32 0, %v135
    %v137 = vrot.slane %v132, %v136
    %v155 = vunpack.c.l.b16 %v116
    %v156 = vunpack.c.l.b16 %v117
    %v157 = vunpack.c.l.b16 %v118
    %v158 = vunpack.c.l.b16 %v119
    %v159 = vunpack.c.l.b16 %v120
    %v160 = vunpack.c.l.b16 %v121
    %v161 = vunpack.c.l.b16 %v122
    %v162 = vunpack.c.l.b16 %v123
    %v163 = vunpack.c.l.b16 %v124
    %v164 = vunpack.c.l.b16 %v125
    %v165 = vunpack.c.l.b16 %v126
    %v166 = vunpack.c.l.b16 %v127
    %v167 = vunpack.c.l.b16 %v128
    %v168 = vunpack.c.l.b16 %v129
    %v169 = vunpack.c.l.b16 %v130
    %v170 = vunpack.c.l.b16 %v131
    %v171 = vpack.c.b16 %v156, %v155
    %v172 = vpack.c.b16 %v158, %v157
    %v173 = vpack.c.b16 %v160, %v159
    %v174 = vpack.c.b16 %v162, %v161
    %v175 = vpack.c.b16 %v164, %v163
    %v176 = vpack.c.b16 %v166, %v165
    %v177 = vpack.c.b16 %v168, %v167
    %v178 = vpack.c.b16 %v170, %v169
    %187 = vmatprep.subr.bf16.mxu0 0
    %188 = vmatpush1.bf16.msra.mxu0 %v171
    %189 = vmatprep.subr.bf16.mxu0 0
    %190 = vmatpush1.bf16.msra.mxu0 %v172
    %191 = vmatprep.subr.bf16.mxu0 0
    %192 = vmatpush1.bf16.msra.mxu0 %v173
    %193 = vmatprep.subr.bf16.mxu0 0
    %194 = vmatpush1.bf16.msra.mxu0 %v174
    %195 = vmatprep.subr.bf16.mxu0 0
    %196 = vmatpush1.bf16.msra.mxu0 %v175
    %197 = vmatprep.subr.bf16.mxu0 0
    %198 = vmatpush1.bf16.msra.mxu0 %v176
    %199 = vmatprep.subr.bf16.mxu0 0
    %200 = vmatpush1.bf16.msra.mxu0 %v177
    %201 = vmatprep.subr.bf16.mxu0 0
    %202 = vmatpush1.bf16.msra.mxu0 %v178
    %203 = vmatprep.subr.bf16.mxu0 0
    %204 = vmatpush1.bf16.msra.mxu0 0
    %205 = vmatprep.subr.bf16.mxu0 0
    %206 = vmatpush1.bf16.msra.mxu0 0
    %207 = vmatprep.subr.bf16.mxu0 0
    %208 = vmatpush1.bf16.msra.mxu0 0
    %209 = vmatprep.subr.bf16.mxu0 0
    %210 = vmatpush1.bf16.msra.mxu0 0
    %211 = vmatprep.subr.bf16.mxu0 0
    %212 = vmatpush1.bf16.msra.mxu0 0
    %213 = vmatprep.subr.bf16.mxu0 0
    %214 = vmatpush1.bf16.msra.mxu0 0
    %215 = vmatprep.subr.bf16.mxu0 0
    %216 = vmatpush1.bf16.msra.mxu0 0
    %217 = vmatprep.subr.bf16.mxu0 0
    %218 = vmatpush1.bf16.msra.mxu0 0
    %219 = vmatprep.mubr.bf16.mxu0 0
    %220 = vmatmul.mubr.bf16.gmra.mrb[0].mxu0 %v115
    %v221 = vpop.f32.mrb[0].mxu0
    %v222 = vadd.f32 %v137, %v221
    %v223 = vpop.f32.mrb[0].mxu0
    %v224 = vpop.f32.mrb[0].mxu0
    %v225 = vadd.f32 %v137, %v224
    %v226 = vpop.f32.mrb[0].mxu0
    %227 = vdwg.mxu0
    %228 = vst.msk [vmem:[#allocation2] sm:$0xff] %vm52, %v222
    %229 = vst.msk [vmem:[#allocation2 + $0x8] sm:$0xff] %vm52, %v225
    // Predicated region
    $region22: #{tpu_custom_call.1} parent=1 // pred_check
      _
    $region23: #{tpu_custom_call.1} parent=1 // pred_check_branch
      %231 = sbr.rel (0) target = $region25
    $region24: #{tpu_custom_call.1} parent=1 // pred_region
      %s233 = ssub.s32 256, 256
      %234 = vsyncadd [#allocation3], %s233
      %s235 = sshll.u32 [#allocation2], 4
      %s236 = int_to_ptr.vmem [resolvable:$true] %s235
      %241 = dma.vmem_to_hbm [thread:$0]  %s236, 256, %s5, [#allocation3], 128, 128, 8
    $region25: #{tpu_custom_call.1} parent=1 // pred_fallthru
      _
    // Predicated region
    $region26: #{tpu_custom_call.1} parent=1 // pred_check
      _
    $region27: #{tpu_custom_call.1} parent=1 // pred_check_branch
      %243 = sbr.rel (0) target = $region29
    $region28: #{tpu_custom_call.1} parent=1 // pred_region
      %244 = dma.done [#allocation3], 256
    $region29: #{tpu_custom_call.1} parent=1 // pred_fallthru
      _
    %245 = vsyncpa [#allocation3], 1

</llo_original>
